<compile_context>
chip_gen: v5e
topology: v5e:2x2
jax: 0.10.0
libtpu: 0.0.40
codegen_flags: <defaults>
</compile_context>

<pallas_src>
import functools

import jax
import jax.numpy as jnp
from jax.experimental import pallas as pl
from jax.experimental.pallas import tpu as pltpu

L = 64   # self.L
D = 64   # self.D
K = 1    # self.K

H1 = 256  # feature-extractor hidden 1
H2 = 128  # feature-extractor hidden 2

# Bias-slab lane offsets (each segment starts on a 128-lane boundary so the
# in-kernel static slices are tile-aligned).
_OFF_B1 = 0      # width 256
_OFF_B2 = 256    # width 128
_OFF_B3 = 384    # width 64
_OFF_BVU = 512   # width 128 (bv | bu)
_OFF_BA = 640    # width 1
_OFF_BC = 768    # width num_class (<= 128)
BIAS_W = 896


def _gated_attention_kernel(
    num_class,
    x_ref,       # (N, F)          per-bag block
    w1_ref,      # (F, 256)
    w2_ref,      # (256, 128)
    w3_ref,      # (128, L)
    wvu_ref,     # (L, 2D)         fused V/U projection
    wa_ref,      # (1, D)          attention weights as a row
    wc_ref,      # (L, num_class)
    bias_ref,    # (1, BIAS_W)     all biases packed
    y_ref,       # (1, num_class)
    a_ref,       # (N, 1)          softmax attention (transposed in wrapper)
):
    x = x_ref[...]

    b1 = bias_ref[:, _OFF_B1:_OFF_B1 + H1]
    b2 = bias_ref[:, _OFF_B2:_OFF_B2 + H2]
    b3 = bias_ref[:, _OFF_B3:_OFF_B3 + L]
    bvu = bias_ref[:, _OFF_BVU:_OFF_BVU + 2 * D]
    ba = bias_ref[:, _OFF_BA:_OFF_BA + 1]
    bc = bias_ref[:, _OFF_BC:_OFF_BC + num_class]

    # feature_extractor: 3 x (Linear + ReLU) -> H: (N, L)
    h = jnp.maximum(
        jnp.dot(x, w1_ref[...], preferred_element_type=jnp.float32) + b1, 0.0)
    h = jnp.maximum(
        jnp.dot(h, w2_ref[...], preferred_element_type=jnp.float32) + b2, 0.0)
    Hf = jnp.maximum(
        jnp.dot(h, w3_ref[...], preferred_element_type=jnp.float32) + b3, 0.0)

    # gated attention: one fused (L, 2D) matmul, split lanes [0:D] / [D:2D]
    g = jnp.dot(Hf, wvu_ref[...], preferred_element_type=jnp.float32) + bvu
    a_v = jnp.tanh(g[:, :D])
    a_u = jax.nn.sigmoid(g[:, D:2 * D])
    gated = a_v * a_u                                            # (N, D)

    # attention logits (K == 1): VPU multiply + lane reduce (no 1-col MXU push)
    A = jnp.sum(gated * wa_ref[...], axis=-1, keepdims=True) + ba  # (N, 1)

    # softmax over the instance axis, kept in (N, 1) layout (no transpose)
    A_max = jnp.max(A, axis=0, keepdims=True)
    A_exp = jnp.exp(A - A_max)
    denom = jnp.sum(A_exp, axis=0, keepdims=True)
    A_soft = A_exp * pl.reciprocal(denom, approx=True)           # (N, 1)

    # attention pooling: M = A^T @ H as broadcast-multiply + sublane reduce
    M = jnp.sum(A_soft * Hf, axis=0, keepdims=True)              # (1, L)

    # classifier (spec has no sigmoid/softmax over classes: plain Linear)
    y = jnp.dot(M, wc_ref[...], preferred_element_type=jnp.float32) + bc

    y_ref[...] = y
    a_ref[...] = A_soft


def init_params(key, in_features, num_class):
    """PyTorch nn.Linear-style init (uniform +-1/sqrt(fan_in)); W as (in, out)."""
    def linear(k, fan_in, fan_out):
        kw, kb = jax.random.split(k)
        bound = 1.0 / jnp.sqrt(jnp.float32(fan_in))
        w = jax.random.uniform(kw, (fan_in, fan_out), jnp.float32, -bound, bound)
        b = jax.random.uniform(kb, (1, fan_out), jnp.float32, -bound, bound)
        return w, b

    keys = jax.random.split(key, 7)
    w1, b1 = linear(keys[0], in_features, H1)
    w2, b2 = linear(keys[1], H1, H2)
    w3, b3 = linear(keys[2], H2, L)
    wv, bv = linear(keys[3], L, D)
    wu, bu = linear(keys[4], L, D)
    wa, ba = linear(keys[5], D, K)
    wc, bc = linear(keys[6], L * K, num_class)
    return (w1, b1, w2, b2, w3, b3, wv, bv, wu, bu, wa, ba, wc, bc)


def pack_params(params, num_class):
    """Fuse V/U weights, make wa a row vector, pack all biases into one slab."""
    assert num_class <= 128, "bias slab layout assumes num_class <= 128"
    (w1, b1, w2, b2, w3, b3, wv, bv, wu, bu, wa, ba, wc, bc) = params
    w_vu = jnp.concatenate([wv, wu], axis=1)      # (L, 2D)
    wa_row = wa.T                                 # (1, D)
    bias = jnp.zeros((1, BIAS_W), jnp.float32)
    bias = bias.at[:, _OFF_B1:_OFF_B1 + H1].set(b1)
    bias = bias.at[:, _OFF_B2:_OFF_B2 + H2].set(b2)
    bias = bias.at[:, _OFF_B3:_OFF_B3 + L].set(b3)
    bias = bias.at[:, _OFF_BVU:_OFF_BVU + D].set(bv)
    bias = bias.at[:, _OFF_BVU + D:_OFF_BVU + 2 * D].set(bu)
    bias = bias.at[:, _OFF_BA:_OFF_BA + K].set(ba)
    bias = bias.at[:, _OFF_BC:_OFF_BC + num_class].set(bc)
    return (w1, w2, w3, w_vu, wa_row, wc, bias)


@functools.partial(jax.jit, static_argnames=("num_class",))
def gated_attention_batched(x_bags, packed, num_class):
    """x_bags: (B, N, F) -> (Y_prob: (B, 1, num_class), A: (B, 1, N))."""
    B, N, F = x_bags.shape
    w1, w2, w3, w_vu, wa_row, wc, bias = packed

    const = lambda b: (0, 0)  # weights: same block every grid step -> VMEM-resident
    y, a = pl.pallas_call(
        functools.partial(_gated_attention_kernel, num_class),
        grid=(B,),
        in_specs=[
            pl.BlockSpec((None, N, F), lambda b: (b, 0, 0)),   # x, per bag
            pl.BlockSpec(w1.shape, const),
            pl.BlockSpec(w2.shape, const),
            pl.BlockSpec(w3.shape, const),
            pl.BlockSpec(w_vu.shape, const),
            pl.BlockSpec(wa_row.shape, const),
            pl.BlockSpec(wc.shape, const),
            pl.BlockSpec(bias.shape, const),
        ],
        out_specs=(
            pl.BlockSpec((None, 1, num_class), lambda b: (b, 0, 0)),
            pl.BlockSpec((None, N, 1), lambda b: (b, 0, 0)),
        ),
        out_shape=(
            jax.ShapeDtypeStruct((B, 1, num_class), jnp.float32),  # Y_prob
            jax.ShapeDtypeStruct((B, N, 1), jnp.float32),          # A (column)
        ),
        compiler_params=pltpu.CompilerParams(
            dimension_semantics=("parallel",)),                    # 2 TCs on v7x
    )(x_bags, w1, w2, w3, w_vu, wa_row, wc, bias)

    # (B, N, 1) -> (B, 1, N): the transpose the PyTorch module does, done for
    # free in the wrapper instead of inside the kernel.
    return y, jnp.swapaxes(a, 1, 2)


def gated_attention_forward(x, packed, num_class):
    """Matches the PyTorch module: x is (1, N, in_features) (one bag)."""
    y, a = gated_attention_batched(x, packed, num_class)
    return y[0], a[0]                      # (1, num_class), (K=1, N)


def reference_forward(x, params):
    """Pure-JAX reference for correctness checking (x: (1, N, F))."""
    (w1, b1, w2, b2, w3, b3, wv, bv, wu, bu, wa, ba, wc, bc) = params
    x2d = jnp.squeeze(x, axis=0)
    h = jax.nn.relu(x2d @ w1 + b1)
    h = jax.nn.relu(h @ w2 + b2)
    Hf = jax.nn.relu(h @ w3 + b3)
    a_v = jnp.tanh(Hf @ wv + bv)
    a_u = jax.nn.sigmoid(Hf @ wu + bu)
    A = (a_v * a_u) @ wa + ba
    A = jax.nn.softmax(A.T, axis=1)
    M = A @ Hf
    y = M @ wc + bc
    return y, A


if __name__ == "__main__":
    in_features = 32
    num_class = 2
    n_instances = 8
    n_bags = 4

    key = jax.random.PRNGKey(0)
    k_x, k_p = jax.random.split(key)

    params = init_params(k_p, in_features, num_class)
    packed = pack_params(params, num_class)

    # Batched path: several bags through one pallas_call (grid over bags).
    x_bags = jax.random.normal(
        k_x, (n_bags, n_instances, in_features), jnp.float32)
    y_all, a_all = gated_attention_batched(x_bags, packed, num_class)
    y_all, a_all = jax.block_until_ready((y_all, a_all))

    # Single-bag path identical to the PyTorch module's (1, N, F) input.
    y1, a1 = gated_attention_forward(x_bags[:1], packed, num_class)
    y1, a1 = jax.block_until_ready((y1, a1))

    # Tolerance loosened from 1e-5 because the softmax denominator uses the
    # approximate EUP reciprocal (pl.reciprocal(..., approx=True)).
    atol = rtol = 5e-3
    for b in range(n_bags):
        y_ref, a_ref = reference_forward(x_bags[b:b + 1], params)
        assert jnp.allclose(y_all[b], y_ref, atol=atol, rtol=rtol), \
            f"Y_prob mismatch for bag {b}"
        assert jnp.allclose(a_all[b], a_ref, atol=atol, rtol=rtol), \
            f"A mismatch for bag {b}"

    y_ref0, a_ref0 = reference_forward(x_bags[0:1], params)
    assert jnp.allclose(y1, y_ref0, atol=atol, rtol=rtol), "single-bag Y mismatch"
    assert jnp.allclose(a1, a_ref0, atol=atol, rtol=rtol), "single-bag A mismatch"

    print("KERNEL_OK")
</pallas_src>

<mosaic_0001>
module attributes {stable_mosaic.version = 11 : i64} {
  func.func @_gated_attention_kernel(%arg0: i32, %arg1: memref<1x8x32xf32, #tpu.memory_space<vmem>>, %arg2: memref<32x256xf32, #tpu.memory_space<vmem>>, %arg3: memref<256x128xf32, #tpu.memory_space<vmem>>, %arg4: memref<128x64xf32, #tpu.memory_space<vmem>>, %arg5: memref<64x128xf32, #tpu.memory_space<vmem>>, %arg6: memref<1x64xf32, #tpu.memory_space<vmem>>, %arg7: memref<64x2xf32, #tpu.memory_space<vmem>>, %arg8: memref<1x896xf32, #tpu.memory_space<vmem>>, %arg9: memref<1x1x2xf32, #tpu.memory_space<vmem>>, %arg10: memref<1x8x1xf32, #tpu.memory_space<vmem>>) attributes {dimension_semantics = [#tpu.dimension_semantics<parallel>], iteration_bounds = array<i64: 4>, scalar_prefetch = 0 : i64, scratch_operands = 0 : i64, tpu.core_type = #tpu.core_type<tc>, window_params = [{transform_indices = @transform_0, window_bounds = array<i64: 1, 8, 32>}, {pipeline_mode = #tpu.pipeline_mode<synchronous>, transform_indices = @transform_1, window_bounds = array<i64: 32, 256>}, {pipeline_mode = #tpu.pipeline_mode<synchronous>, transform_indices = @transform_2, window_bounds = array<i64: 256, 128>}, {pipeline_mode = #tpu.pipeline_mode<synchronous>, transform_indices = @transform_3, window_bounds = array<i64: 128, 64>}, {pipeline_mode = #tpu.pipeline_mode<synchronous>, transform_indices = @transform_4, window_bounds = array<i64: 64, 128>}, {pipeline_mode = #tpu.pipeline_mode<synchronous>, transform_indices = @transform_5, window_bounds = array<i64: 1, 64>}, {pipeline_mode = #tpu.pipeline_mode<synchronous>, transform_indices = @transform_6, window_bounds = array<i64: 64, 2>}, {pipeline_mode = #tpu.pipeline_mode<synchronous>, transform_indices = @transform_7, window_bounds = array<i64: 1, 896>}, {transform_indices = @transform_8, window_bounds = array<i64: 1, 1, 2>}, {transform_indices = @transform_9, window_bounds = array<i64: 1, 8, 1>}]} {
    %c0 = arith.constant 0 : index
    %c0_0 = arith.constant 0 : index
    %c0_1 = arith.constant 0 : index
    %0 = vector.load %arg1[%c0, %c0_0, %c0_1] : memref<1x8x32xf32, #tpu.memory_space<vmem>>, vector<1x8x32xf32>
    %1 = vector.shape_cast %0 : vector<1x8x32xf32> to vector<8x32xf32>
    %c0_2 = arith.constant 0 : index
    %c0_3 = arith.constant 0 : index
    %2 = vector.load %arg8[%c0_2, %c0_3] : memref<1x896xf32, #tpu.memory_space<vmem>>, vector<1x256xf32>
    %c0_4 = arith.constant 0 : index
    %c256 = arith.constant 256 : index
    %3 = vector.load %arg8[%c0_4, %c256] : memref<1x896xf32, #tpu.memory_space<vmem>>, vector<1x128xf32>
    %c0_5 = arith.constant 0 : index
    %c384 = arith.constant 384 : index
    %4 = vector.load %arg8[%c0_5, %c384] : memref<1x896xf32, #tpu.memory_space<vmem>>, vector<1x64xf32>
    %c0_6 = arith.constant 0 : index
    %c512 = arith.constant 512 : index
    %5 = vector.load %arg8[%c0_6, %c512] : memref<1x896xf32, #tpu.memory_space<vmem>>, vector<1x128xf32>
    %c0_7 = arith.constant 0 : index
    %c640 = arith.constant 640 : index
    %6 = vector.load %arg8[%c0_7, %c640] : memref<1x896xf32, #tpu.memory_space<vmem>>, vector<1x1xf32>
    %c0_8 = arith.constant 0 : index
    %c768 = arith.constant 768 : index
    %7 = vector.load %arg8[%c0_8, %c768] : memref<1x896xf32, #tpu.memory_space<vmem>>, vector<1x2xf32>
    %c0_9 = arith.constant 0 : index
    %c0_10 = arith.constant 0 : index
    %8 = vector.load %arg2[%c0_9, %c0_10] : memref<32x256xf32, #tpu.memory_space<vmem>>, vector<32x256xf32>
    %cst = arith.constant dense<0.000000e+00> : vector<8x256xf32>
    %9 = tpu.matmul %1, %8, %cst {dimension_numbers = #tpu.dot_dimension_numbers<[1], [0], [0], [1], [0, 0, 1, 1], [], []>} : vector<8x32xf32>, vector<32x256xf32>, vector<8x256xf32> -> vector<8x256xf32>
    %10 = vector.broadcast %2 : vector<1x256xf32> to vector<8x256xf32>
    %11 = arith.addf %9, %10 : vector<8x256xf32>
    %cst_11 = arith.constant 0.000000e+00 : f32
    %12 = vector.broadcast %cst_11 : f32 to vector<8x256xf32>
    %13 = arith.maximumf %11, %12 : vector<8x256xf32>
    %c0_12 = arith.constant 0 : index
    %c0_13 = arith.constant 0 : index
    %14 = vector.load %arg3[%c0_12, %c0_13] : memref<256x128xf32, #tpu.memory_space<vmem>>, vector<256x128xf32>
    %cst_14 = arith.constant dense<0.000000e+00> : vector<8x128xf32>
    %15 = tpu.matmul %13, %14, %cst_14 {dimension_numbers = #tpu.dot_dimension_numbers<[1], [0], [0], [1], [0, 0, 1, 1], [], []>} : vector<8x256xf32>, vector<256x128xf32>, vector<8x128xf32> -> vector<8x128xf32>
    %16 = vector.broadcast %3 : vector<1x128xf32> to vector<8x128xf32>
    %17 = arith.addf %15, %16 : vector<8x128xf32>
    %cst_15 = arith.constant 0.000000e+00 : f32
    %18 = vector.broadcast %cst_15 : f32 to vector<8x128xf32>
    %19 = arith.maximumf %17, %18 : vector<8x128xf32>
    %c0_16 = arith.constant 0 : index
    %c0_17 = arith.constant 0 : index
    %20 = vector.load %arg4[%c0_16, %c0_17] : memref<128x64xf32, #tpu.memory_space<vmem>>, vector<128x64xf32>
    %cst_18 = arith.constant dense<0.000000e+00> : vector<8x64xf32>
    %21 = tpu.matmul %19, %20, %cst_18 {dimension_numbers = #tpu.dot_dimension_numbers<[1], [0], [0], [1], [0, 0, 1, 1], [], []>} : vector<8x128xf32>, vector<128x64xf32>, vector<8x64xf32> -> vector<8x64xf32>
    %22 = vector.broadcast %4 : vector<1x64xf32> to vector<8x64xf32>
    %23 = arith.addf %21, %22 : vector<8x64xf32>
    %cst_19 = arith.constant 0.000000e+00 : f32
    %24 = vector.broadcast %cst_19 : f32 to vector<8x64xf32>
    %25 = arith.maximumf %23, %24 : vector<8x64xf32>
    %c0_20 = arith.constant 0 : index
    %c0_21 = arith.constant 0 : index
    %26 = vector.load %arg5[%c0_20, %c0_21] : memref<64x128xf32, #tpu.memory_space<vmem>>, vector<64x128xf32>
    %cst_22 = arith.constant dense<0.000000e+00> : vector<8x128xf32>
    %27 = tpu.matmul %25, %26, %cst_22 {dimension_numbers = #tpu.dot_dimension_numbers<[1], [0], [0], [1], [0, 0, 1, 1], [], []>} : vector<8x64xf32>, vector<64x128xf32>, vector<8x128xf32> -> vector<8x128xf32>
    %28 = vector.broadcast %5 : vector<1x128xf32> to vector<8x128xf32>
    %29 = arith.addf %27, %28 : vector<8x128xf32>
    %30 = vector.extract_strided_slice %29 {offsets = [0, 0], sizes = [8, 64], strides = [1, 1]} : vector<8x128xf32> to vector<8x64xf32>
    %31 = math.tanh %30 : vector<8x64xf32>
    %32 = vector.extract_strided_slice %29 {offsets = [0, 64], sizes = [8, 64], strides = [1, 1]} : vector<8x128xf32> to vector<8x64xf32>
    %33 = arith.negf %32 : vector<8x64xf32>
    %34 = math.exp %33 : vector<8x64xf32>
    %cst_23 = arith.constant 1.000000e+00 : f32
    %35 = vector.broadcast %cst_23 : f32 to vector<8x64xf32>
    %36 = arith.addf %35, %34 : vector<8x64xf32>
    %37 = arith.divf %35, %36 : vector<8x64xf32>
    %38 = arith.mulf %31, %37 : vector<8x64xf32>
    %c0_24 = arith.constant 0 : index
    %c0_25 = arith.constant 0 : index
    %39 = vector.load %arg6[%c0_24, %c0_25] : memref<1x64xf32, #tpu.memory_space<vmem>>, vector<1x64xf32>
    %40 = vector.broadcast %39 : vector<1x64xf32> to vector<8x64xf32>
    %41 = arith.mulf %38, %40 : vector<8x64xf32>
    %cst_26 = arith.constant dense<0.000000e+00> : vector<8xf32>
    %42 = vector.multi_reduction <add>, %41, %cst_26 [1] : vector<8x64xf32> to vector<8xf32>
    %43 = vector.shape_cast %42 : vector<8xf32> to vector<8x1xf32>
    %44 = vector.broadcast %6 : vector<1x1xf32> to vector<8x1xf32>
    %45 = arith.addf %43, %44 : vector<8x1xf32>
    %cst_27 = arith.constant dense<0xFF800000> : vector<1xf32>
    %46 = vector.multi_reduction <maximumf>, %45, %cst_27 [0] : vector<8x1xf32> to vector<1xf32>
    %47 = vector.shape_cast %46 : vector<1xf32> to vector<1x1xf32>
    %48 = vector.broadcast %47 : vector<1x1xf32> to vector<8x1xf32>
    %49 = arith.subf %45, %48 : vector<8x1xf32>
    %50 = math.exp %49 : vector<8x1xf32>
    %cst_28 = arith.constant dense<0.000000e+00> : vector<1xf32>
    %51 = vector.multi_reduction <add>, %50, %cst_28 [0] : vector<8x1xf32> to vector<1xf32>
    %52 = vector.shape_cast %51 : vector<1xf32> to vector<1x1xf32>
    %53 = tpu.reciprocal %52 {approx = true} : vector<1x1xf32> -> vector<1x1xf32>
    %54 = vector.broadcast %53 : vector<1x1xf32> to vector<8x1xf32>
    %55 = arith.mulf %50, %54 : vector<8x1xf32>
    %56 = vector.broadcast %55 : vector<8x1xf32> to vector<8x64xf32>
    %57 = arith.mulf %56, %25 : vector<8x64xf32>
    %cst_29 = arith.constant dense<0.000000e+00> : vector<64xf32>
    %58 = vector.multi_reduction <add>, %57, %cst_29 [0] : vector<8x64xf32> to vector<64xf32>
    %59 = vector.shape_cast %58 : vector<64xf32> to vector<1x64xf32>
    %c0_30 = arith.constant 0 : index
    %c0_31 = arith.constant 0 : index
    %60 = vector.load %arg7[%c0_30, %c0_31] : memref<64x2xf32, #tpu.memory_space<vmem>>, vector<64x2xf32>
    %cst_32 = arith.constant dense<0.000000e+00> : vector<1x2xf32>
    %61 = tpu.matmul %59, %60, %cst_32 {dimension_numbers = #tpu.dot_dimension_numbers<[1], [0], [0], [1], [0, 0, 1, 1], [], []>} : vector<1x64xf32>, vector<64x2xf32>, vector<1x2xf32> -> vector<1x2xf32>
    %62 = arith.addf %61, %7 : vector<1x2xf32>
    %c0_33 = arith.constant 0 : index
    %c0_34 = arith.constant 0 : index
    %c0_35 = arith.constant 0 : index
    %63 = vector.load %arg9[%c0_33, %c0_34, %c0_35] : memref<1x1x2xf32, #tpu.memory_space<vmem>>, vector<1x1x2xf32>
    %64 = vector.shape_cast %63 : vector<1x1x2xf32> to vector<1x2xf32>
    %65 = vector.shape_cast %62 : vector<1x2xf32> to vector<1x1x2xf32>
    tpu.vector_store %arg9[%c0_33, %c0_34, %c0_35], %65 {strides = array<i32>} : memref<1x1x2xf32, #tpu.memory_space<vmem>>, vector<1x1x2xf32>,
    %c0_36 = arith.constant 0 : index
    %c0_37 = arith.constant 0 : index
    %c0_38 = arith.constant 0 : index
    %66 = vector.load %arg10[%c0_36, %c0_37, %c0_38] : memref<1x8x1xf32, #tpu.memory_space<vmem>>, vector<1x8x1xf32>
    %67 = vector.shape_cast %66 : vector<1x8x1xf32> to vector<8x1xf32>
    %68 = vector.shape_cast %55 : vector<8x1xf32> to vector<1x8x1xf32>
    tpu.vector_store %arg10[%c0_36, %c0_37, %c0_38], %68 {strides = array<i32>} : memref<1x8x1xf32, #tpu.memory_space<vmem>>, vector<1x8x1xf32>,
    return
  }
  func.func @transform_0(%arg0: i32) -> (i32, i32, i32) {
    %c0_i32 = arith.constant 0 : i32
    %c0_i32_0 = arith.constant 0 : i32
    %c0_i32_1 = arith.constant 0 : i32
    return %arg0, %c0_i32, %c0_i32_0 : i32, i32, i32
  }
  func.func @transform_1(%arg0: i32) -> (i32, i32) {
    %c0_i32 = arith.constant 0 : i32
    %c0_i32_0 = arith.constant 0 : i32
    %c0_i32_1 = arith.constant 0 : i32
    return %c0_i32, %c0_i32_0 : i32, i32
  }
  func.func @transform_2(%arg0: i32) -> (i32, i32) {
    %c0_i32 = arith.constant 0 : i32
    %c0_i32_0 = arith.constant 0 : i32
    %c0_i32_1 = arith.constant 0 : i32
    return %c0_i32, %c0_i32_0 : i32, i32
  }
  func.func @transform_3(%arg0: i32) -> (i32, i32) {
    %c0_i32 = arith.constant 0 : i32
    %c0_i32_0 = arith.constant 0 : i32
    %c0_i32_1 = arith.constant 0 : i32
    return %c0_i32, %c0_i32_0 : i32, i32
  }
  func.func @transform_4(%arg0: i32) -> (i32, i32) {
    %c0_i32 = arith.constant 0 : i32
    %c0_i32_0 = arith.constant 0 : i32
    %c0_i32_1 = arith.constant 0 : i32
    return %c0_i32, %c0_i32_0 : i32, i32
  }
  func.func @transform_5(%arg0: i32) -> (i32, i32) {
    %c0_i32 = arith.constant 0 : i32
    %c0_i32_0 = arith.constant 0 : i32
    %c0_i32_1 = arith.constant 0 : i32
    return %c0_i32, %c0_i32_0 : i32, i32
  }
  func.func @transform_6(%arg0: i32) -> (i32, i32) {
    %c0_i32 = arith.constant 0 : i32
    %c0_i32_0 = arith.constant 0 : i32
    %c0_i32_1 = arith.constant 0 : i32
    return %c0_i32, %c0_i32_0 : i32, i32
  }
  func.func @transform_7(%arg0: i32) -> (i32, i32) {
    %c0_i32 = arith.constant 0 : i32
    %c0_i32_0 = arith.constant 0 : i32
    %c0_i32_1 = arith.constant 0 : i32
    return %c0_i32, %c0_i32_0 : i32, i32
  }
  func.func @transform_8(%arg0: i32) -> (i32, i32, i32) {
    %c0_i32 = arith.constant 0 : i32
    %c0_i32_0 = arith.constant 0 : i32
    %c0_i32_1 = arith.constant 0 : i32
    return %arg0, %c0_i32, %c0_i32_0 : i32, i32, i32
  }
  func.func @transform_9(%arg0: i32) -> (i32, i32, i32) {
    %c0_i32 = arith.constant 0 : i32
    %c0_i32_0 = arith.constant 0 : i32
    %c0_i32_1 = arith.constant 0 : i32
    return %arg0, %c0_i32, %c0_i32_0 : i32, i32, i32
  }
}

</mosaic_0001>

<llo_original>
// kernel: gated_attention_batched.1
$region0: #{gated_attention_batched.1}
  #allocation0 [shape = 'u32[]', space=smem, size = 0x4, offset = 0x4, fixed_abs, tag = 'smem constant byte address 0x4 - core index']
  #allocation1 [shape = 'u32[72,128]{1,0:T(1,128)}', space=vmem, size = 0x9000, scoped, tag = 'internal scratch']
  %s0 = inlined_call_operand.vmem [shape: f32[4,8,32], index: 0, kind: input, shape index: {}]
  %s1 = inlined_call_operand.vmem [shape: f32[32,256], index: 1, kind: input, shape index: {}]
  %s2 = inlined_call_operand.hbm [shape: f32[256,128], index: 2, kind: input, shape index: {}]
  %s3 = inlined_call_operand.vmem [shape: f32[128,64], index: 3, kind: input, shape index: {}]
  %s4 = inlined_call_operand.vmem [shape: f32[64,128], index: 4, kind: input, shape index: {}]
  %s5 = inlined_call_operand.vmem [shape: f32[1,64], index: 5, kind: input, shape index: {}]
  %s6 = inlined_call_operand.vmem [shape: f32[64,2], index: 6, kind: input, shape index: {}]
  %s7 = inlined_call_operand.vmem [shape: f32[1,896], index: 7, kind: input, shape index: {}]
  %s8 = inlined_call_operand.vmem [shape: f32[4,1,2], index: 8, kind: output, shape index: {0}]
  %s9 = inlined_call_operand.vmem [shape: f32[4,8,1], index: 9, kind: output, shape index: {1}]
  %10 = xla_tuple %s8, %s9
  %s11 = sld [smem:[#allocation0]]
  $region77: #{gated_attention_batched.1} parent=0
    _
  %s13 = ssub.s32 1, %s11
  %s14 = scalar_select 0, %s13, %s11
  $region1: #{gated_attention_batched.1} parent=0
    #allocation2 [shape = 'u8[131072]{0}', space=vmem, size = 0x20000, scoped, tag = 'input window, operand 2, single buffered']
    #allocation3 [shape = 's32[2]{0}', space=sflag, size = 0x8, scoped, tag = 'scoped memory for gated_attention_batched.1']
    %15 = vsyncpa [#allocation3], 0
    loop: start=0, step=1, limit=6
    $region2: #{gated_attention_batched.1} parent=1 // loop_pre_header
      _
    $region3: #{gated_attention_batched.1} parent=1 // loop_header
      %s17 = sphi 0, %s21
      %p18 = scmp.ge.s32.totalorder %s17, 6
      %s27 = sphi 0, %s29
      %s30 = sphi 0, %s27
      %s31 = sphi 0, %s30
      %s47 = sphi 0, %s31
      %s51 = sphi 0, %s51
      %s53 = sphi 0, %s51
      %s54 = sphi 0, %s53
      %s68 = sphi 0, %s54
      %s72 = sphi 0, %s72
      %s74 = sphi 0, %s72
      %s75 = sphi 0, %s74
      %s89 = sphi 0, %s75
      %s93 = sphi 0, %s93
      %s95 = sphi 0, %s93
      %s96 = sphi 0, %s95
      %s110 = sphi 0, %s96
      %s114 = sphi 0, %s114
      %s116 = sphi 0, %s114
      %s117 = sphi 0, %s116
      %s131 = sphi 0, %s117
      %s135 = sphi 0, %s135
      %s137 = sphi 0, %s135
      %s138 = sphi 0, %s137
      %s152 = sphi 0, %s138
      %s156 = sphi 0, %s156
      %s158 = sphi 0, %s156
      %s159 = sphi 0, %s158
      %s173 = sphi 0, %s159
      %s177 = sphi 0, %s177
      %s179 = sphi 0, %s177
      %s180 = sphi 0, %s179
      %s194 = sphi 0, %s180
      %s200 = sphi 0, %s202
      %s203 = sphi 0, %s200
      %s204 = sphi 0, %s203
      %s220 = sphi 0, %s204
      %s226 = sphi 0, %s228
      %s229 = sphi 0, %s226
      %s230 = sphi 0, %s229
      %s246 = sphi 0, %s230
    $region4: #{gated_attention_batched.1} parent=1 // loop_header_branch
      %20 = sbr.rel (%p18) target = $region8
    $region5: #{gated_attention_batched.1} parent=1 // loop_body
      %s22 = ssub.s32 %s17, 1
      %s23 = ssub.s32 %s17, 2
      %s24 = sadd.s32 %s17, 1
      %s25 = ssub.s32 %s17, %s24
      %p26 = scmp.eq.s32.totalorder %s25, 0
      %s28 = sadd.s32 %s27, 1
      %s29 = scalar_select %p26, %s27, %s28
      %p32 = pneg %p26
      %p33 = scmp.eq.s32.totalorder %s17, 3
      %p34 = por %p32, %p33
      %p35 = scmp.ne.s32.totalorder %s27, %s30
      %p36 = scmp.eq.s32.totalorder %s17, 0
      %p37 = por %p35, %p36
      %p38 = scmp.ne.s32.totalorder %s27, %s30
      %p39 = scmp.eq.s32.totalorder %s22, 3
      %p40 = por %p38, %p39
      %p41 = scmp.ne.s32.totalorder %s30, %s31
      %p42 = scmp.eq.s32.totalorder %s22, 0
      %p43 = por %p41, %p42
      %p44 = scmp.ne.s32.totalorder %s30, %s31
      %p45 = scmp.eq.s32.totalorder %s23, 3
      %p46 = por %p44, %p45
      %p48 = scmp.ne.s32.totalorder %s31, %s47
      %p49 = scmp.eq.s32.totalorder %s23, 0
      %p50 = por %p48, %p49
      %s52 = sadd.s32 %s51, 1
      %p55 = scmp.eq.s32.totalorder %s17, 3
      %p56 = scmp.ne.s32.totalorder %s51, %s53
      %p57 = scmp.eq.s32.totalorder %s17, 0
      %p58 = por %p56, %p57
      %p59 = scmp.ne.s32.totalorder %s51, %s53
      %p60 = scmp.eq.s32.totalorder %s22, 3
      %p61 = por %p59, %p60
      %p62 = scmp.ne.s32.totalorder %s53, %s54
      %p63 = scmp.eq.s32.totalorder %s22, 0
      %p64 = por %p62, %p63
      %p65 = scmp.ne.s32.totalorder %s53, %s54
      %p66 = scmp.eq.s32.totalorder %s23, 3
      %p67 = por %p65, %p66
      %p69 = scmp.ne.s32.totalorder %s54, %s68
      %p70 = scmp.eq.s32.totalorder %s23, 0
      %p71 = por %p69, %p70
      %s73 = sadd.s32 %s72, 1
      %p76 = scmp.eq.s32.totalorder %s17, 3
      %p77 = scmp.ne.s32.totalorder %s72, %s74
      %p78 = scmp.eq.s32.totalorder %s17, 0
      %p79 = por %p77, %p78
      %p80 = scmp.ne.s32.totalorder %s72, %s74
      %p81 = scmp.eq.s32.totalorder %s22, 3
      %p82 = por %p80, %p81
      %p83 = scmp.ne.s32.totalorder %s74, %s75
      %p84 = scmp.eq.s32.totalorder %s22, 0
      %p85 = por %p83, %p84
      %p86 = scmp.ne.s32.totalorder %s74, %s75
      %p87 = scmp.eq.s32.totalorder %s23, 3
      %p88 = por %p86, %p87
      %p90 = scmp.ne.s32.totalorder %s75, %s89
      %p91 = scmp.eq.s32.totalorder %s23, 0
      %p92 = por %p90, %p91
      %s94 = sadd.s32 %s93, 1
      %p97 = scmp.eq.s32.totalorder %s17, 3
      %p98 = scmp.ne.s32.totalorder %s93, %s95
      %p99 = scmp.eq.s32.totalorder %s17, 0
      %p100 = por %p98, %p99
      %p101 = scmp.ne.s32.totalorder %s93, %s95
      %p102 = scmp.eq.s32.totalorder %s22, 3
      %p103 = por %p101, %p102
      %p104 = scmp.ne.s32.totalorder %s95, %s96
      %p105 = scmp.eq.s32.totalorder %s22, 0
      %p106 = por %p104, %p105
      %p107 = scmp.ne.s32.totalorder %s95, %s96
      %p108 = scmp.eq.s32.totalorder %s23, 3
      %p109 = por %p107, %p108
      %p111 = scmp.ne.s32.totalorder %s96, %s110
      %p112 = scmp.eq.s32.totalorder %s23, 0
      %p113 = por %p111, %p112
      %s115 = sadd.s32 %s114, 1
      %p118 = scmp.eq.s32.totalorder %s17, 3
      %p119 = scmp.ne.s32.totalorder %s114, %s116
      %p120 = scmp.eq.s32.totalorder %s17, 0
      %p121 = por %p119, %p120
      %p122 = scmp.ne.s32.totalorder %s114, %s116
      %p123 = scmp.eq.s32.totalorder %s22, 3
      %p124 = por %p122, %p123
      %p125 = scmp.ne.s32.totalorder %s116, %s117
      %p126 = scmp.eq.s32.totalorder %s22, 0
      %p127 = por %p125, %p126
      %p128 = scmp.ne.s32.totalorder %s116, %s117
      %p129 = scmp.eq.s32.totalorder %s23, 3
      %p130 = por %p128, %p129
      %p132 = scmp.ne.s32.totalorder %s117, %s131
      %p133 = scmp.eq.s32.totalorder %s23, 0
      %p134 = por %p132, %p133
      %s136 = sadd.s32 %s135, 1
      %p139 = scmp.eq.s32.totalorder %s17, 3
      %p140 = scmp.ne.s32.totalorder %s135, %s137
      %p141 = scmp.eq.s32.totalorder %s17, 0
      %p142 = por %p140, %p141
      %p143 = scmp.ne.s32.totalorder %s135, %s137
      %p144 = scmp.eq.s32.totalorder %s22, 3
      %p145 = por %p143, %p144
      %p146 = scmp.ne.s32.totalorder %s137, %s138
      %p147 = scmp.eq.s32.totalorder %s22, 0
      %p148 = por %p146, %p147
      %p149 = scmp.ne.s32.totalorder %s137, %s138
      %p150 = scmp.eq.s32.totalorder %s23, 3
      %p151 = por %p149, %p150
      %p153 = scmp.ne.s32.totalorder %s138, %s152
      %p154 = scmp.eq.s32.totalorder %s23, 0
      %p155 = por %p153, %p154
      %s157 = sadd.s32 %s156, 1
      %p160 = scmp.eq.s32.totalorder %s17, 3
      %p161 = scmp.ne.s32.totalorder %s156, %s158
      %p162 = scmp.eq.s32.totalorder %s17, 0
      %p163 = por %p161, %p162
      %p164 = scmp.ne.s32.totalorder %s156, %s158
      %p165 = scmp.eq.s32.totalorder %s22, 3
      %p166 = por %p164, %p165
      %p167 = scmp.ne.s32.totalorder %s158, %s159
      %p168 = scmp.eq.s32.totalorder %s22, 0
      %p169 = por %p167, %p168
      %p170 = scmp.ne.s32.totalorder %s158, %s159
      %p171 = scmp.eq.s32.totalorder %s23, 3
      %p172 = por %p170, %p171
      %p174 = scmp.ne.s32.totalorder %s159, %s173
      %p175 = scmp.eq.s32.totalorder %s23, 0
      %p176 = por %p174, %p175
      %s178 = sadd.s32 %s177, 1
      %p181 = scmp.eq.s32.totalorder %s17, 3
      %p182 = scmp.ne.s32.totalorder %s177, %s179
      %p183 = scmp.eq.s32.totalorder %s17, 0
      %p184 = por %p182, %p183
      %p185 = scmp.ne.s32.totalorder %s177, %s179
      %p186 = scmp.eq.s32.totalorder %s22, 3
      %p187 = por %p185, %p186
      %p188 = scmp.ne.s32.totalorder %s179, %s180
      %p189 = scmp.eq.s32.totalorder %s22, 0
      %p190 = por %p188, %p189
      %p191 = scmp.ne.s32.totalorder %s179, %s180
      %p192 = scmp.eq.s32.totalorder %s23, 3
      %p193 = por %p191, %p192
      %p195 = scmp.ne.s32.totalorder %s180, %s194
      %p196 = scmp.eq.s32.totalorder %s23, 0
      %p197 = por %p195, %p196
      %s198 = ssub.s32 %s17, %s24
      %p199 = scmp.eq.s32.totalorder %s198, 0
      %s201 = sadd.s32 %s200, 1
      %s202 = scalar_select %p199, %s200, %s201
      %p205 = pneg %p199
      %p206 = scmp.eq.s32.totalorder %s17, 3
      %p207 = por %p205, %p206
      %p208 = scmp.ne.s32.totalorder %s200, %s203
      %p209 = scmp.eq.s32.totalorder %s17, 0
      %p210 = por %p208, %p209
      %p211 = scmp.ne.s32.totalorder %s200, %s203
      %p212 = scmp.eq.s32.totalorder %s22, 3
      %p213 = por %p211, %p212
      %p214 = scmp.ne.s32.totalorder %s203, %s204
      %p215 = scmp.eq.s32.totalorder %s22, 0
      %p216 = por %p214, %p215
      %p217 = scmp.ne.s32.totalorder %s203, %s204
      %p218 = scmp.eq.s32.totalorder %s23, 3
      %p219 = por %p217, %p218
      %p221 = scmp.ne.s32.totalorder %s204, %s220
      %p222 = scmp.eq.s32.totalorder %s23, 0
      %p223 = por %p221, %p222
      %s224 = ssub.s32 %s17, %s24
      %p225 = scmp.eq.s32.totalorder %s224, 0
      %s227 = sadd.s32 %s226, 1
      %s228 = scalar_select %p225, %s226, %s227
      %p231 = pneg %p225
      %p232 = scmp.eq.s32.totalorder %s17, 3
      %p233 = por %p231, %p232
      %p234 = scmp.ne.s32.totalorder %s226, %s229
      %p235 = scmp.eq.s32.totalorder %s17, 0
      %p236 = por %p234, %p235
      %p237 = scmp.ne.s32.totalorder %s226, %s229
      %p238 = scmp.eq.s32.totalorder %s22, 3
      %p239 = por %p237, %p238
      %p240 = scmp.ne.s32.totalorder %s229, %s230
      %p241 = scmp.eq.s32.totalorder %s22, 0
      %p242 = por %p240, %p241
      %p243 = scmp.ne.s32.totalorder %s229, %s230
      %p244 = scmp.eq.s32.totalorder %s23, 3
      %p245 = por %p243, %p244
      %p247 = scmp.ne.s32.totalorder %s230, %s246
      %p248 = scmp.eq.s32.totalorder %s23, 0
      %p249 = por %p247, %p248
      %p250 = scmp.le.s32.totalorder 1, %s17
      %p251 = scmp.lt.s32.totalorder %s17, 5
      %p252 = pnand %p250, %p251
      %p253 = pneg %p252
      // Predicated region
      $region9: #{gated_attention_batched.1} parent=5 // pred_check
        _
      $region10: #{gated_attention_batched.1} parent=5 // pred_check_branch
        %255 = sbr.rel (%p252) target = $region12
      $region11: #{gated_attention_batched.1} parent=5 // pred_region
        %s256 = ssub.s32 %s17, 1
        // Predicated region
        $region13: #{gated_attention_batched.1} parent=11 // pred_check
          %p257 = pneg %p64
        $region14: #{gated_attention_batched.1} parent=11 // pred_check_branch
          %259 = sbr.rel (%p257) target = $region16
        $region15: #{gated_attention_batched.1} parent=11 // pred_region
          _
        $region16: #{gated_attention_batched.1} parent=11 // pred_fallthru
          _
        // Predicated region
        $region17: #{gated_attention_batched.1} parent=11 // pred_check
          %p260 = pneg %p85
        $region18: #{gated_attention_batched.1} parent=11 // pred_check_branch
          %262 = sbr.rel (%p260) target = $region20
        $region19: #{gated_attention_batched.1} parent=11 // pred_region
          %264 = vsyncadd [#allocation3], 0
          %s265 = sshll.u32 %s2, 4
          %s266 = int_to_ptr.hbm [resolvable:$true] %s265
          %s267 = sshll.u32 [#allocation2], 4
          %s268 = int_to_ptr.vmem [resolvable:$true] %s267
          %273 = dma.hbm_to_vmem [thread:$0]  %s266, 4096, %s268, [#allocation3], 128, 128, 8
        $region20: #{gated_attention_batched.1} parent=11 // pred_fallthru
          _
        // Predicated region
        $region21: #{gated_attention_batched.1} parent=11 // pred_check
          %p274 = pneg %p106
        $region22: #{gated_attention_batched.1} parent=11 // pred_check_branch
          %276 = sbr.rel (%p274) target = $region24
        $region23: #{gated_attention_batched.1} parent=11 // pred_region
          _
        $region24: #{gated_attention_batched.1} parent=11 // pred_fallthru
          _
        // Predicated region
        $region25: #{gated_attention_batched.1} parent=11 // pred_check
          %p277 = pneg %p127
        $region26: #{gated_attention_batched.1} parent=11 // pred_check_branch
          %279 = sbr.rel (%p277) target = $region28
        $region27: #{gated_attention_batched.1} parent=11 // pred_region
          _
        $region28: #{gated_attention_batched.1} parent=11 // pred_fallthru
          _
        // Predicated region
        $region29: #{gated_attention_batched.1} parent=11 // pred_check
          %p280 = pneg %p148
        $region30: #{gated_attention_batched.1} parent=11 // pred_check_branch
          %282 = sbr.rel (%p280) target = $region32
        $region31: #{gated_attention_batched.1} parent=11 // pred_region
          _
        $region32: #{gated_attention_batched.1} parent=11 // pred_fallthru
          _
        // Predicated region
        $region33: #{gated_attention_batched.1} parent=11 // pred_check
          %p283 = pneg %p169
        $region34: #{gated_attention_batched.1} parent=11 // pred_check_branch
          %285 = sbr.rel (%p283) target = $region36
        $region35: #{gated_attention_batched.1} parent=11 // pred_region
          _
        $region36: #{gated_attention_batched.1} parent=11 // pred_fallthru
          _
        // Predicated region
        $region37: #{gated_attention_batched.1} parent=11 // pred_check
          %p286 = pneg %p190
        $region38: #{gated_attention_batched.1} parent=11 // pred_check_branch
          %288 = sbr.rel (%p286) target = $region40
        $region39: #{gated_attention_batched.1} parent=11 // pred_region
          _
        $region40: #{gated_attention_batched.1} parent=11 // pred_fallthru
          _
      $region12: #{gated_attention_batched.1} parent=5 // pred_fallthru
        _
      %p289 = scmp.lt.s32.totalorder %s17, 4
      // Predicated region
      $region41: #{gated_attention_batched.1} parent=5 // pred_check
        %p290 = pneg %p289
      $region42: #{gated_attention_batched.1} parent=5 // pred_check_branch
        %292 = sbr.rel (%p290) target = $region44
      $region43: #{gated_attention_batched.1} parent=5 // pred_region
        // Predicated region
        $region45: #{gated_attention_batched.1} parent=43 // pred_check
          %p293 = pneg %p37
        $region46: #{gated_attention_batched.1} parent=43 // pred_check_branch
          %295 = sbr.rel (%p293) target = $region48
        $region47: #{gated_attention_batched.1} parent=43 // pred_region
          %p296 = scmp.lt.s32.totalorder %s17, 3
          %s297 = scalar_select %p296, %s17, 3
          %s298 = smul.addr %s297, 8
          %s299 = scalar_lea.vmem %s0, %s298
        $region48: #{gated_attention_batched.1} parent=43 // pred_fallthru
          _
      $region44: #{gated_attention_batched.1} parent=5 // pred_fallthru
        _
      %p300 = scmp.le.s32.totalorder 1, %s17
      %p301 = scmp.lt.s32.totalorder %s17, 5
      %p302 = pnand %p300, %p301
      %p303 = pneg %p302
      // Predicated region
      $region49: #{gated_attention_batched.1} parent=5 // pred_check
        _
      $region50: #{gated_attention_batched.1} parent=5 // pred_check_branch
        %305 = sbr.rel (%p302) target = $region52
      $region51: #{gated_attention_batched.1} parent=5 // pred_region
        %s306 = ssub.s32 %s17, 1
        // Predicated region
        $region53: #{gated_attention_batched.1} parent=51 // pred_check
          %p307 = pneg %p85
        $region54: #{gated_attention_batched.1} parent=51 // pred_check_branch
          %309 = sbr.rel (%p307) target = $region56
        $region55: #{gated_attention_batched.1} parent=51 // pred_region
          %311 = dma.done [#allocation3], 4096
        $region56: #{gated_attention_batched.1} parent=51 // pred_fallthru
          _
        %p312 = scmp.lt.s32.totalorder %s22, 3
        %s313 = scalar_select %p312, %s22, 3
        %s314 = smul.addr %s313, 8
        %s315 = scalar_lea.vmem %s0, %s314
        %p316 = pneg %p43
        %p317 = pneg %p40
        %p318 = pneg %p64
        %p319 = pneg %p61
        %p320 = pneg %p85
        %p321 = pneg %p82
        %p322 = pneg %p106
        %p323 = pneg %p103
        %p324 = pneg %p127
        %p325 = pneg %p124
        %p326 = pneg %p148
        %p327 = pneg %p145
        %p328 = pneg %p169
        %p329 = pneg %p166
        %p330 = pneg %p190
        %p331 = pneg %p187
        %p332 = pneg %p216
        %p333 = pneg %p213
        %p334 = scmp.lt.s32.totalorder %s22, 3
        %s335 = scalar_select %p334, %s22, 3
        %s336 = scalar_lea.vmem %s8, %s335
        %p337 = pneg %p242
        %p338 = pneg %p239
        %p339 = scmp.lt.s32.totalorder %s22, 3
        %s340 = scalar_select %p339, %s22, 3
        %s341 = smul.addr %s340, 8
        %s342 = scalar_lea.vmem %s9, %s341
        %p343 = scmp.lt.s32.totalorder %s22, 3
        %s344 = scalar_select %p343, %s22, 3
        %s345 = smul.addr %s344, 8
        %s346 = scalar_lea.vmem %s0, %s345
        %p347 = scmp.lt.s32.totalorder %s22, 3
        %s348 = scalar_select %p347, %s22, 3
        %s349 = scalar_lea.vmem %s8, %s348
        %p350 = scmp.lt.s32.totalorder %s22, 3
        %s351 = scalar_select %p350, %s22, 3
        %s352 = smul.addr %s351, 8
        %s353 = scalar_lea.vmem %s9, %s352
        %v354 = vld [vmem:[%s346] sm:$0xff]
        %v355 = vld [vmem:[%s7] sm:$0x3]
        %v356 = vld [vmem:[%s7 + $0x2] sm:$0x1]
        %v357 = vld [vmem:[%s7 + $0x3] sm:$0x1]
        %v358 = vld [vmem:[%s7 + $0x4] sm:$0x1]
        %v359 = vld [vmem:[%s7 + $0x5] sm:$0x1]
        %v360 = vld [vmem:[%s7 + $0x6] sm:$0x1]
        %v361 = vld [vmem:[%s1] sm:$0xff]
        %v362 = vld [vmem:[%s1 + $0x8] sm:$0xff]
        %v363 = vld [vmem:[%s1 + $0x10] sm:$0xff]
        %v364 = vld [vmem:[%s1 + $0x18] sm:$0xff]
        %v365 = vld [vmem:[%s1 + $0x20] sm:$0xff]
        %v366 = vld [vmem:[%s1 + $0x28] sm:$0xff]
        %v367 = vld [vmem:[%s1 + $0x30] sm:$0xff]
        %v368 = vld [vmem:[%s1 + $0x38] sm:$0xff]
        %v370 = vperm.slane %v355, 0
        %v371 = vperm.slane %v355, 1
        %vm374 = vcmask 261120
        %v376 = vsel %vm374, %v354, 0
        %378 = vmatpush.msra.mxu0 0.0
        %379 = vmatpush.msra.mxu0 0.0
        %380 = vmatpush.msra.mxu0 0.0
        %381 = vmatpush.msra.mxu0 0.0
        %382 = vmatpush.msra.mxu0 0.0
        %383 = vmatpush.msra.mxu0 0.0
        %384 = vmatpush.msra.mxu0 0.0
        %385 = vmatpush.msra.mxu0 0.0
        %386 = vmatpush.msra.mxu0 0.0
        %387 = vmatpush.msra.mxu0 0.0
        %388 = vmatpush.msra.mxu0 0.0
        %389 = vmatpush.msra.mxu0 0.0
        %390 = vmatpush.msra.mxu0 %v367
        %391 = vmatpush.msra.mxu0 %v365
        %392 = vmatpush.msra.mxu0 %v363
        %393 = vmatpush.msra.mxu0 %v361
        %394 = vmatmul.f32.gmra.mxu0 %v376
        %v395 = vpop.f32.mrf.mxu0
        %v396 = vadd.f32 %v370, %v395
        %397 = vdwg.mxu0
        %398 = vmatpush.msra.mxu0 0.0
        %399 = vmatpush.msra.mxu0 0.0
        %400 = vmatpush.msra.mxu0 0.0
        %401 = vmatpush.msra.mxu0 0.0
        %402 = vmatpush.msra.mxu0 0.0
        %403 = vmatpush.msra.mxu0 0.0
        %404 = vmatpush.msra.mxu0 0.0
        %405 = vmatpush.msra.mxu0 0.0
        %406 = vmatpush.msra.mxu0 0.0
        %407 = vmatpush.msra.mxu0 0.0
        %408 = vmatpush.msra.mxu0 0.0
        %409 = vmatpush.msra.mxu0 0.0
        %410 = vmatpush.msra.mxu0 %v368
        %411 = vmatpush.msra.mxu0 %v366
        %412 = vmatpush.msra.mxu0 %v364
        %413 = vmatpush.msra.mxu0 %v362
        %414 = vmatmul.f32.gmra.mxu0 %v376
        %v415 = vpop.f32.mrf.mxu0
        %v416 = vadd.f32 %v371, %v415
        %417 = vdwg.mxu0
        %v418 = vmax.f32 %v396, 0.0
        %v419 = vmax.f32 %v416, 0.0
        %v420 = vld [vmem:[#allocation2] sm:$0xff]
        %v421 = vld [vmem:[#allocation2 + $0x8] sm:$0xff]
        %v422 = vld [vmem:[#allocation2 + $0x10] sm:$0xff]
        %v423 = vld [vmem:[#allocation2 + $0x18] sm:$0xff]
        %v424 = vld [vmem:[#allocation2 + $0x20] sm:$0xff]
        %v425 = vld [vmem:[#allocation2 + $0x28] sm:$0xff]
        %v426 = vld [vmem:[#allocation2 + $0x30] sm:$0xff]
        %v427 = vld [vmem:[#allocation2 + $0x38] sm:$0xff]
        %v428 = vld [vmem:[#allocation2 + $0x40] sm:$0xff]
        %v429 = vld [vmem:[#allocation2 + $0x48] sm:$0xff]
        %v430 = vld [vmem:[#allocation2 + $0x50] sm:$0xff]
        %v431 = vld [vmem:[#allocation2 + $0x58] sm:$0xff]
        %v432 = vld [vmem:[#allocation2 + $0x60] sm:$0xff]
        %v433 = vld [vmem:[#allocation2 + $0x68] sm:$0xff]
        %v434 = vld [vmem:[#allocation2 + $0x70] sm:$0xff]
        %v435 = vld [vmem:[#allocation2 + $0x78] sm:$0xff]
        %v436 = vld [vmem:[#allocation2 + $0x80] sm:$0xff]
        %v437 = vld [vmem:[#allocation2 + $0x88] sm:$0xff]
        %v438 = vld [vmem:[#allocation2 + $0x90] sm:$0xff]
        %v439 = vld [vmem:[#allocation2 + $0x98] sm:$0xff]
        %v440 = vld [vmem:[#allocation2 + $0xa0] sm:$0xff]
        %v441 = vld [vmem:[#allocation2 + $0xa8] sm:$0xff]
        %v442 = vld [vmem:[#allocation2 + $0xb0] sm:$0xff]
        %v443 = vld [vmem:[#allocation2 + $0xb8] sm:$0xff]
        %v444 = vld [vmem:[#allocation2 + $0xc0] sm:$0xff]
        %v445 = vld [vmem:[#allocation2 + $0xc8] sm:$0xff]
        %v446 = vld [vmem:[#allocation2 + $0xd0] sm:$0xff]
        %v447 = vld [vmem:[#allocation2 + $0xd8] sm:$0xff]
        %v448 = vld [vmem:[#allocation2 + $0xe0] sm:$0xff]
        %v449 = vld [vmem:[#allocation2 + $0xe8] sm:$0xff]
        %v450 = vld [vmem:[#allocation2 + $0xf0] sm:$0xff]
        %v451 = vld [vmem:[#allocation2 + $0xf8] sm:$0xff]
        %v453 = vperm.slane %v356, 0
        %455 = vmatpush.msra.mxu0 %v435
        %456 = vmatpush.msra.mxu0 %v434
        %457 = vmatpush.msra.mxu0 %v433
        %458 = vmatpush.msra.mxu0 %v432
        %459 = vmatpush.msra.mxu0 %v431
        %460 = vmatpush.msra.mxu0 %v430
        %461 = vmatpush.msra.mxu0 %v429
        %462 = vmatpush.msra.mxu0 %v428
        %463 = vmatpush.msra.mxu0 %v427
        %464 = vmatpush.msra.mxu0 %v426
        %465 = vmatpush.msra.mxu0 %v425
        %466 = vmatpush.msra.mxu0 %v424
        %467 = vmatpush.msra.mxu0 %v423
        %468 = vmatpush.msra.mxu0 %v422
        %469 = vmatpush.msra.mxu0 %v421
        %470 = vmatpush.msra.mxu0 %v420
        %471 = vmatmul.f32.gmra.mxu0 %v418
        %v472 = vpop.f32.mrf.mxu0
        %v473 = vadd.f32 %v453, %v472
        %474 = vdwg.mxu0
        %475 = vmatpush.msra.mxu0 %v451
        %476 = vmatpush.msra.mxu0 %v450
        %477 = vmatpush.msra.mxu0 %v449
        %478 = vmatpush.msra.mxu0 %v448
        %479 = vmatpush.msra.mxu0 %v447
        %480 = vmatpush.msra.mxu0 %v446
        %481 = vmatpush.msra.mxu0 %v445
        %482 = vmatpush.msra.mxu0 %v444
        %483 = vmatpush.msra.mxu0 %v443
        %484 = vmatpush.msra.mxu0 %v442
        %485 = vmatpush.msra.mxu0 %v441
        %486 = vmatpush.msra.mxu0 %v440
        %487 = vmatpush.msra.mxu0 %v439
        %488 = vmatpush.msra.mxu0 %v438
        %489 = vmatpush.msra.mxu0 %v437
        %490 = vmatpush.msra.mxu0 %v436
        %491 = vmatmul.f32.gmra.mxu0 %v419
        %v492 = vpop.f32.mrf.mxu0
        %v493 = vadd.f32 %v473, %v492
        %494 = vdwg.mxu0
        %v495 = vmax.f32 %v493, 0.0
        %v496 = vld [vmem:[%s3] sm:$0xff]
        %v497 = vld [vmem:[%s3 + $0x8] sm:$0xff]
        %v498 = vld [vmem:[%s3 + $0x10] sm:$0xff]
        %v499 = vld [vmem:[%s3 + $0x18] sm:$0xff]
        %v500 = vld [vmem:[%s3 + $0x20] sm:$0xff]
        %v501 = vld [vmem:[%s3 + $0x28] sm:$0xff]
        %v502 = vld [vmem:[%s3 + $0x30] sm:$0xff]
        %v503 = vld [vmem:[%s3 + $0x38] sm:$0xff]
        %v504 = vld [vmem:[%s3 + $0x40] sm:$0xff]
        %v505 = vld [vmem:[%s3 + $0x48] sm:$0xff]
        %v506 = vld [vmem:[%s3 + $0x50] sm:$0xff]
        %v507 = vld [vmem:[%s3 + $0x58] sm:$0xff]
        %v508 = vld [vmem:[%s3 + $0x60] sm:$0xff]
        %v509 = vld [vmem:[%s3 + $0x68] sm:$0xff]
        %v510 = vld [vmem:[%s3 + $0x70] sm:$0xff]
        %v511 = vld [vmem:[%s3 + $0x78] sm:$0xff]
        %v513 = vperm.slane %v357, 0
        %515 = vmatpush.msra.mxu0 %v511
        %516 = vmatpush.msra.mxu0 %v510
        %517 = vmatpush.msra.mxu0 %v509
        %518 = vmatpush.msra.mxu0 %v508
        %519 = vmatpush.msra.mxu0 %v507
        %520 = vmatpush.msra.mxu0 %v506
        %521 = vmatpush.msra.mxu0 %v505
        %522 = vmatpush.msra.mxu0 %v504
        %523 = vmatpush.msra.mxu0 %v503
        %524 = vmatpush.msra.mxu0 %v502
        %525 = vmatpush.msra.mxu0 %v501
        %526 = vmatpush.msra.mxu0 %v500
        %527 = vmatpush.msra.mxu0 %v499
        %528 = vmatpush.msra.mxu0 %v498
        %529 = vmatpush.msra.mxu0 %v497
        %530 = vmatpush.msra.mxu0 %v496
        %531 = vmatmul.f32.gmra.mxu0 %v495
        %v532 = vpop.f32.mrf.mxu0
        %v533 = vadd.f32 %v513, %v532
        %534 = vdwg.mxu0
        %v535 = vmax.f32 %v533, 0.0
        %v536 = vld [vmem:[%s4] sm:$0xff]
        %v537 = vld [vmem:[%s4 + $0x8] sm:$0xff]
        %v538 = vld [vmem:[%s4 + $0x10] sm:$0xff]
        %v539 = vld [vmem:[%s4 + $0x18] sm:$0xff]
        %v540 = vld [vmem:[%s4 + $0x20] sm:$0xff]
        %v541 = vld [vmem:[%s4 + $0x28] sm:$0xff]
        %v542 = vld [vmem:[%s4 + $0x30] sm:$0xff]
        %v543 = vld [vmem:[%s4 + $0x38] sm:$0xff]
        %v545 = vperm.slane %v358, 0
        %vm547 = vcmask 523264
        %v549 = vsel %vm547, %v535, 0
        %551 = vmatpush.msra.mxu0 0.0
        %552 = vmatpush.msra.mxu0 0.0
        %553 = vmatpush.msra.mxu0 0.0
        %554 = vmatpush.msra.mxu0 0.0
        %555 = vmatpush.msra.mxu0 0.0
        %556 = vmatpush.msra.mxu0 0.0
        %557 = vmatpush.msra.mxu0 0.0
        %558 = vmatpush.msra.mxu0 0.0
        %559 = vmatpush.msra.mxu0 %v543
        %560 = vmatpush.msra.mxu0 %v542
        %561 = vmatpush.msra.mxu0 %v541
        %562 = vmatpush.msra.mxu0 %v540
        %563 = vmatpush.msra.mxu0 %v539
        %564 = vmatpush.msra.mxu0 %v538
        %565 = vmatpush.msra.mxu0 %v537
        %566 = vmatpush.msra.mxu0 %v536
        %567 = vmatmul.f32.gmra.mxu0 %v549
        %v568 = vpop.f32.mrf.mxu0
        %v569 = vadd.f32 %v545, %v568
        %570 = vdwg.mxu0
        %v571 = vtanh.pop %v569
        %v572 = vxor.u32 %v569, 2147483648
        %v573 = vmul.f32 %v572, 1.442695
        %v574 = vpow.pop %v573
        %v575 = vadd.f32 %v574, 1.0
        %v576 = vrcp.pop %v575
        %v577 = vmul.f32 %v575, %v576
        %v578 = vsub.f32 1.0, %v577
        %v579 = vmul.f32 %v576, %v578
        %v580 = vadd.f32 %v576, %v579
        %vm581 = vweird.f32 %v575
        %vm582 = vweird.f32 %v576
        %vm583 = vmor %vm581, %vm582
        %v584 = vsel %vm583, %v576, %v580
        %v585 = vand.u32 2147483647, %v575
        %vm586 = vcmp.eq.f32.partialorder %v585, 8.507059e+37
        %v587 = vand.u32 %v575, 2147483648
        %v588 = vor.u32 1.1754944e-38, %v587
        %v589 = vsel %vm586, %v588, %v584
        %v590 = vmul.f32 1.0, %v589
        %592 = vrot.lane.b32.xlu0 %v590, 64
        %v593 = vpop.permute.xlu0 %592
        %v595 = vmul.f32 %v571, %v593
        %v596 = vld [vmem:[%s5] sm:$0x1]
        %v598 = vperm.slane %v596, 0
        %v600 = vmul.f32 %v595, %v598
        %v601 = vsel %vm547, %v600, 0.0
        %602 = vadd.xlane.f32.xlu0 %v601
        %v603 = vpop.xlane.xlu0 %602
        %v605 = vperm.slane %v359, 0
        %v607 = vadd.f32 %v603, %v605
        %vm608 = vcmask 7168
        %v609 = vsel %vm608, %v607, -inf
        %v610 = vrot.slane %v609, 4
        %v611 = vmax.f32 %v609, %v610
        %v612 = vrot.slane %v611, 2
        %v613 = vmax.f32 %v611, %v612
        %v614 = vrot.slane %v613, 1
        %v615 = vmax.f32 %v613, %v614
        %v616 = vsub.f32 %v607, %v615
        %v617 = vmul.f32 %v616, 1.442695
        %v618 = vpow.pop %v617
        %v619 = vsel %vm608, %v618, 0.0
        %v620 = vrot.slane %v619, 4
        %v621 = vadd.f32 %v619, %v620
        %v622 = vrot.slane %v621, 2
        %v623 = vadd.f32 %v621, %v622
        %v624 = vrot.slane %v623, 1
        %v625 = vadd.f32 %v623, %v624
        %v626 = vrcp.pop %v625
        %v627 = vmul.f32 %v618, %v626
        %629 = vset.pattern.permute.xlu0 0
        %630 = vperm.xlu0 %629, %v627
        %v631 = vpop.permute.xlu0 %630
        %v633 = vmul.f32 %v631, %v535
        %v634 = vsel %vm547, %v633, 0.0
        %v635 = vrot.slane %v634, 4
        %v636 = vadd.f32 %v634, %v635
        %v637 = vrot.slane %v636, 2
        %v638 = vadd.f32 %v636, %v637
        %v639 = vrot.slane %v638, 1
        %v640 = vadd.f32 %v638, %v639
        %v641 = vld [vmem:[%s6] sm:$0xff]
        %v642 = vld [vmem:[%s6 + $0x8] sm:$0xff]
        %v643 = vld [vmem:[%s6 + $0x10] sm:$0xff]
        %v644 = vld [vmem:[%s6 + $0x18] sm:$0xff]
        %v645 = vld [vmem:[%s6 + $0x20] sm:$0xff]
        %v646 = vld [vmem:[%s6 + $0x28] sm:$0xff]
        %v647 = vld [vmem:[%s6 + $0x30] sm:$0xff]
        %v648 = vld [vmem:[%s6 + $0x38] sm:$0xff]
        %v650 = vsel %vm547, %v640, 0
        %652 = vmatpush.msra.mxu0 0.0
        %653 = vmatpush.msra.mxu0 0.0
        %654 = vmatpush.msra.mxu0 0.0
        %655 = vmatpush.msra.mxu0 0.0
        %656 = vmatpush.msra.mxu0 0.0
        %657 = vmatpush.msra.mxu0 0.0
        %658 = vmatpush.msra.mxu0 0.0
        %659 = vmatpush.msra.mxu0 0.0
        %660 = vmatpush.msra.mxu0 %v648
        %661 = vmatpush.msra.mxu0 %v647
        %662 = vmatpush.msra.mxu0 %v646
        %663 = vmatpush.msra.mxu0 %v645
        %664 = vmatpush.msra.mxu0 %v644
        %665 = vmatpush.msra.mxu0 %v643
        %666 = vmatpush.msra.mxu0 %v642
        %667 = vmatpush.msra.mxu0 %v641
        %668 = vmatmul.f32.gmra.mxu0 %v650
        %v669 = vpop.f32.mrf.mxu0
        %v670 = vadd.f32 %v360, %v669
        %671 = vdwg.mxu0
        %vm672 = vcmask 8192
        %673 = vst.msk [vmem:[%s349] sm:$0x1] %vm672, %v670
        %674 = vst.msk [vmem:[%s353] sm:$0xff] %vm608, %v627
        %p675 = scmp.lt.s32.totalorder %s22, 3
        %s676 = scalar_select %p675, %s22, 3
        %s677 = scalar_lea.vmem %s8, %s676
        %p678 = scmp.lt.s32.totalorder %s22, 3
        %s679 = scalar_select %p678, %s22, 3
        %s680 = smul.addr %s679, 8
        %s681 = scalar_lea.vmem %s9, %s680
        // Predicated region
        $region57: #{gated_attention_batched.1} parent=51 // pred_check
          %p682 = pneg %p213
        $region58: #{gated_attention_batched.1} parent=51 // pred_check_branch
          %684 = sbr.rel (%p682) target = $region60
        $region59: #{gated_attention_batched.1} parent=51 // pred_region
          _
        $region60: #{gated_attention_batched.1} parent=51 // pred_fallthru
          _
        // Predicated region
        $region61: #{gated_attention_batched.1} parent=51 // pred_check
          %p685 = pneg %p239
        $region62: #{gated_attention_batched.1} parent=51 // pred_check_branch
          %687 = sbr.rel (%p685) target = $region64
        $region63: #{gated_attention_batched.1} parent=51 // pred_region
          _
        $region64: #{gated_attention_batched.1} parent=51 // pred_fallthru
          _
      $region52: #{gated_attention_batched.1} parent=5 // pred_fallthru
        _
      %p688 = scmp.le.s32.totalorder 2, %s17
      // Predicated region
      $region65: #{gated_attention_batched.1} parent=5 // pred_check
        %p689 = pneg %p688
      $region66: #{gated_attention_batched.1} parent=5 // pred_check_branch
        %691 = sbr.rel (%p689) target = $region68
      $region67: #{gated_attention_batched.1} parent=5 // pred_region
        %s692 = ssub.s32 %s17, 2
        // Predicated region
        $region69: #{gated_attention_batched.1} parent=67 // pred_check
          %p693 = pneg %p219
        $region70: #{gated_attention_batched.1} parent=67 // pred_check_branch
          %695 = sbr.rel (%p693) target = $region72
        $region71: #{gated_attention_batched.1} parent=67 // pred_region
          %p696 = scmp.lt.s32.totalorder %s23, 3
          %s697 = scalar_select %p696, %s23, 3
          %s698 = scalar_lea.vmem %s8, %s697
        $region72: #{gated_attention_batched.1} parent=67 // pred_fallthru
          _
        // Predicated region
        $region73: #{gated_attention_batched.1} parent=67 // pred_check
          %p699 = pneg %p245
        $region74: #{gated_attention_batched.1} parent=67 // pred_check_branch
          %701 = sbr.rel (%p699) target = $region76
        $region75: #{gated_attention_batched.1} parent=67 // pred_region
          %p702 = scmp.lt.s32.totalorder %s23, 3
          %s703 = scalar_select %p702, %s23, 3
          %s704 = smul.addr %s703, 8
          %s705 = scalar_lea.vmem %s9, %s704
        $region76: #{gated_attention_batched.1} parent=67 // pred_fallthru
          _
      $region68: #{gated_attention_batched.1} parent=5 // pred_fallthru
        _
    $region6: #{gated_attention_batched.1} parent=1 // loop_footer
      %s21 = sadd.s32 1, %s17
    $region7: #{gated_attention_batched.1} parent=1 // loop_footer_branch
      %16 = sbr.rel target = $region3
    $region8: #{gated_attention_batched.1} parent=1 // loop_exit
      _
    %706 = vsyncpa [#allocation3], 1
    %s707 = scalar_lea.sflag [#allocation3], 1
    %708 = vsyncpa %s707, 1

</llo_original>
